<compile_context>
chip_gen: v7x
topology: tpu7x:2x2x1
jax: 0.10.0
libtpu: 0.0.40
codegen_flags: <defaults>
</compile_context>

<pallas_src>
import functools
import math

import jax
import jax.numpy as jnp
from jax.experimental import pallas as pl
from jax.experimental.pallas import tpu as pltpu


def _pool_map_kernel(x_ref, w_ref, b_ref, o_ref, *, pooling):
    """One row-tile of utterances.

    x_ref: (TM, L, D)  token embeddings tile (last_hidden_state rows)
    w_ref: (D, U)      mapping weight  (VMEM-resident across grid steps)
    b_ref: (1, U)      mapping bias    (VMEM-resident)
    o_ref: (TM, U)     pooled + mapped output tile
    """
    x = x_ref[...]
    if pooling == "mean":
        pooled = jnp.mean(x, axis=1)            # (TM, D), native dtype
    elif pooling == "max":
        pooled = jnp.max(x, axis=1)
    else:
        raise NotImplementedError(pooling)

    # Native-dtype operands straight onto the MXU, f32 accumulation.
    y = jnp.dot(pooled, w_ref[...], preferred_element_type=jnp.float32)
    y = y + b_ref[...].astype(jnp.float32)
    o_ref[...] = y.astype(o_ref.dtype)


def pooled_mapping(last_hidden_state, w_map, b_map, *, pooling="mean",
                   row_tile=256):
    """last_hidden_state: (N, L, D); w_map: (D, U); b_map: (U,). Returns (N, U)."""
    N, L, D = last_hidden_state.shape
    U = w_map.shape[1]
    # Keep lane dims dense: roberta token_dim (768/1024) and utter_dim must be
    # 128-aligned (pad weights on host if the real utter_dim is not).
    assert D % 128 == 0 and U % 128 == 0, "feature dims must be multiples of 128"

    # Row tile: multiple of 8 (sublane), capped so big inputs still pipeline.
    tm = min(row_tile, max(8, ((N + 7) // 8) * 8))
    tm = ((tm + 7) // 8) * 8
    n_pad = pl.cdiv(N, tm) * tm
    if n_pad != N:
        # Padded tail rows are row-independent garbage; sliced off below.
        last_hidden_state = jnp.pad(
            last_hidden_state, ((0, n_pad - N), (0, 0), (0, 0)))

    b2 = b_map.reshape(1, U)

    x_item = jnp.dtype(last_hidden_state.dtype).itemsize
    w_item = jnp.dtype(w_map.dtype).itemsize
    # Double-buffered in/out tiles + resident weights + headroom; stay well
    # under v7x's 64 MiB physical VMEM per TensorCore.
    vmem_bytes = int(2 * tm * L * D * x_item
                     + 2 * tm * U * x_item
                     + D * U * w_item + U * 4
                     + (4 << 20))
    vmem_bytes = min(max(vmem_bytes, 4 << 20), 48 << 20)

    cost = pl.CostEstimate(
        flops=2 * N * D * U + N * L * D,
        transcendentals=0,
        bytes_accessed=N * L * D * x_item + D * U * w_item + N * U * x_item)

    out = pl.pallas_call(
        functools.partial(_pool_map_kernel, pooling=pooling),
        out_shape=jax.ShapeDtypeStruct((n_pad, U), last_hidden_state.dtype),
        grid=(n_pad // tm,),
        in_specs=[
            pl.BlockSpec((tm, L, D), lambda i: (i, 0, 0)),   # utterance tile
            pl.BlockSpec((D, U), lambda i: (0, 0)),          # resident weight
            pl.BlockSpec((1, U), lambda i: (0, 0)),          # resident bias
        ],
        out_specs=pl.BlockSpec((tm, U), lambda i: (i, 0)),
        compiler_params=pltpu.CompilerParams(
            dimension_semantics=("parallel",),               # megacore on v7x
            vmem_limit_bytes=vmem_bytes),
        cost_estimate=cost,
    )(last_hidden_state, w_map, b2)

    return out[:N]


def _pad_by_conv_len(mapped, conv_len):
    """torch.split(mapped, conv_len) + pad_sequence(batch_first=True)."""
    U = mapped.shape[-1]
    max_len = max(conv_len)
    out = jnp.zeros((len(conv_len), max_len, U), mapped.dtype)
    off = 0
    for b, l in enumerate(conv_len):
        out = out.at[b, :l, :].set(mapped[off:off + l])
        off += l
    return out


def utter_encoder_forward(last_hidden_state, conv_len, w_map, b_map,
                          *, mapping_type="mean"):
    mapped = pooled_mapping(last_hidden_state, w_map, b_map,
                            pooling=mapping_type)
    return _pad_by_conv_len(mapped, conv_len)


def _reference(last_hidden_state, conv_len, w_map, b_map, mapping_type):
    if mapping_type == "mean":
        pooled = jnp.mean(last_hidden_state, axis=1)
    elif mapping_type == "max":
        pooled = jnp.max(last_hidden_state, axis=1)
    else:
        raise NotImplementedError(mapping_type)
    mapped = pooled @ w_map + b_map
    return _pad_by_conv_len(mapped, conv_len)


if __name__ == "__main__":
    key = jax.random.PRNGKey(0)
    kx, kw, kb = jax.random.split(key, 3)

    # Small shapes consistent with UtterEncoder (roberta-base: token_dim=768);
    # utter_dim chosen 128-aligned; 2 conversations of 3 and 2 utterances.
    token_dim, utter_dim, seq_len = 768, 128, 8
    conv_len = [3, 2]
    num_utt = sum(conv_len)

    # Stand-in for RoBERTa's last_hidden_state (the transformer itself is not
    # re-implemented as a Pallas kernel).
    last_hidden_state = jax.random.normal(
        kx, (num_utt, seq_len, token_dim), jnp.float32)

    lim = 1.0 / math.sqrt(token_dim)
    w_map = jax.random.uniform(kw, (token_dim, utter_dim), jnp.float32, -lim, lim)
    b_map = jax.random.uniform(kb, (utter_dim,), jnp.float32, -lim, lim)

    ok = True
    for mt in ("mean", "max"):
        out = utter_encoder_forward(last_hidden_state, conv_len, w_map, b_map,
                                    mapping_type=mt)
        out = jax.block_until_ready(out)
        ref = _reference(last_hidden_state, conv_len, w_map, b_map, mt)
        assert out.shape == (len(conv_len), max(conv_len), utter_dim)
        ok &= bool(jnp.allclose(out, ref, atol=1e-4, rtol=1e-4))
    assert ok, "mismatch vs reference"

    print("KERNEL_OK")
</pallas_src>

<mosaic_0001>
module attributes {stable_mosaic.version = 11 : i64} {
  func.func @_pool_map_kernel(%arg0: i32, %arg1: memref<8x8x768xf32, #tpu.memory_space<vmem>>, %arg2: memref<768x128xf32, #tpu.memory_space<vmem>>, %arg3: memref<1x128xf32, #tpu.memory_space<vmem>>, %arg4: memref<8x128xf32, #tpu.memory_space<vmem>>) attributes {dimension_semantics = [#tpu.dimension_semantics<parallel>], iteration_bounds = array<i64: 1>, scalar_prefetch = 0 : i64, scratch_operands = 0 : i64, tpu.core_type = #tpu.core_type<tc>, window_params = [{transform_indices = @transform_0, window_bounds = array<i64: 8, 8, 768>}, {pipeline_mode = #tpu.pipeline_mode<synchronous>, transform_indices = @transform_1, window_bounds = array<i64: 768, 128>}, {pipeline_mode = #tpu.pipeline_mode<synchronous>, transform_indices = @transform_2, window_bounds = array<i64: 1, 128>}, {transform_indices = @transform_3, window_bounds = array<i64: 8, 128>}]} {
    %c0 = arith.constant 0 : index
    %c0_0 = arith.constant 0 : index
    %c0_1 = arith.constant 0 : index
    %0 = vector.load %arg1[%c0, %c0_0, %c0_1] : memref<8x8x768xf32, #tpu.memory_space<vmem>>, vector<8x8x768xf32>
    %cst = arith.constant dense<0.000000e+00> : vector<8x768xf32>
    %1 = vector.multi_reduction <add>, %0, %cst [1] : vector<8x8x768xf32> to vector<8x768xf32>
    %cst_2 = arith.constant 8.000000e+00 : f32
    %2 = vector.broadcast %cst_2 : f32 to vector<8x768xf32>
    %3 = arith.divf %1, %2 : vector<8x768xf32>
    %c0_3 = arith.constant 0 : index
    %c0_4 = arith.constant 0 : index
    %4 = vector.load %arg2[%c0_3, %c0_4] : memref<768x128xf32, #tpu.memory_space<vmem>>, vector<768x128xf32>
    %cst_5 = arith.constant dense<0.000000e+00> : vector<8x128xf32>
    %5 = tpu.matmul %3, %4, %cst_5 {dimension_numbers = #tpu.dot_dimension_numbers<[1], [0], [0], [1], [0, 0, 1, 1], [], []>} : vector<8x768xf32>, vector<768x128xf32>, vector<8x128xf32> -> vector<8x128xf32>
    %c0_6 = arith.constant 0 : index
    %c0_7 = arith.constant 0 : index
    %6 = vector.load %arg3[%c0_6, %c0_7] : memref<1x128xf32, #tpu.memory_space<vmem>>, vector<1x128xf32>
    %7 = vector.broadcast %6 : vector<1x128xf32> to vector<8x128xf32>
    %8 = arith.addf %5, %7 : vector<8x128xf32>
    %c0_8 = arith.constant 0 : index
    %c0_9 = arith.constant 0 : index
    %9 = vector.load %arg4[%c0_8, %c0_9] : memref<8x128xf32, #tpu.memory_space<vmem>>, vector<8x128xf32>
    tpu.vector_store %arg4[%c0_8, %c0_9], %8 {strides = array<i32>} : memref<8x128xf32, #tpu.memory_space<vmem>>, vector<8x128xf32>,
    return
  }
  func.func @transform_0(%arg0: i32) -> (i32, i32, i32) {
    %c0_i32 = arith.constant 0 : i32
    %c0_i32_0 = arith.constant 0 : i32
    %c0_i32_1 = arith.constant 0 : i32
    return %arg0, %c0_i32, %c0_i32_0 : i32, i32, i32
  }
  func.func @transform_1(%arg0: i32) -> (i32, i32) {
    %c0_i32 = arith.constant 0 : i32
    %c0_i32_0 = arith.constant 0 : i32
    %c0_i32_1 = arith.constant 0 : i32
    return %c0_i32, %c0_i32_0 : i32, i32
  }
  func.func @transform_2(%arg0: i32) -> (i32, i32) {
    %c0_i32 = arith.constant 0 : i32
    %c0_i32_0 = arith.constant 0 : i32
    %c0_i32_1 = arith.constant 0 : i32
    return %c0_i32, %c0_i32_0 : i32, i32
  }
  func.func @transform_3(%arg0: i32) -> (i32, i32) {
    %c0_i32 = arith.constant 0 : i32
    %c0_i32_0 = arith.constant 0 : i32
    return %arg0, %c0_i32 : i32, i32
  }
}

</mosaic_0001>

<llo_original>
// kernel: tpu_custom_call.1
$region0: #{tpu_custom_call.1}
  #allocation0 [shape = 'u32[]', space=smem, size = 0x4, offset = 0x4, fixed_abs, tag = 'smem constant byte address 0x4 - core index']
  #allocation1 [shape = 'u32[144,128]{1,0:T(1,128)}', space=vmem, size = 0x12000, scoped, tag = 'internal scratch']
  %s0 = inlined_call_operand.hbm [shape: f32[8,8,768], index: 0, kind: input, shape index: {}]
  %s1 = inlined_call_operand.hbm [shape: f32[768,128], index: 1, kind: input, shape index: {}]
  %s2 = inlined_call_operand.vmem [shape: f32[1,128], index: 2, kind: input, shape index: {}]
  %s3 = inlined_call_operand.hbm [shape: f32[8,128], index: 3, kind: output, shape index: {}]
  %s4 = sld [smem:[#allocation0]]
  $region30: #{tpu_custom_call.1} parent=0
    _
  %s6 = ssub.s32 1, %s4
  %s7 = scalar_select 0, %s6, %s4
  $region1: #{tpu_custom_call.1} parent=0
    #allocation2 [shape = 'u8[196608]{0}', space=vmem, size = 0x30000, scoped, tag = 'input window, operand 0, single buffered']
    #allocation3 [shape = 's32[1]{0}', space=sflag, size = 0x4, scoped, tag = 'scoped memory for tpu_custom_call.1']
    #allocation4 [shape = 's32[1]{0}', space=sflag, size = 0x4, scoped, tag = 'scoped memory for tpu_custom_call.1']
    #allocation5 [shape = 'u8[393216]{0}', space=vmem, size = 0x60000, scoped, tag = 'input window, operand 1, single buffered']
    #allocation6 [shape = 's32[1]{0}', space=sflag, size = 0x4, scoped, tag = 'scoped memory for tpu_custom_call.1']
    #allocation7 [shape = 'u8[4096]{0}', space=vmem, size = 0x1000, scoped, tag = 'output window, operand 0, single buffered']
    %8 = vsyncpa [#allocation3], 0
    %9 = vsyncpa [#allocation6], 0
    %10 = vsyncpa [#allocation4], 0
    // Predicated region
    $region2: #{tpu_custom_call.1} parent=1 // pred_check
      _
    $region3: #{tpu_custom_call.1} parent=1 // pred_check_branch
      %12 = sbr.rel (0) target = $region5
    $region4: #{tpu_custom_call.1} parent=1 // pred_region
      %s14 = ssub.s32 6144, 6144
      %15 = vsyncadd [#allocation3], %s14
      %s16 = sshll.u32 [#allocation2], 4
      %s17 = int_to_ptr.vmem [resolvable:$true] %s16
      %22 = dma.hbm_to_vmem [thread:$0]  %s0, 6144, %s17, [#allocation3], 768, 768, 48
    $region5: #{tpu_custom_call.1} parent=1 // pred_fallthru
      _
    // Predicated region
    $region6: #{tpu_custom_call.1} parent=1 // pred_check
      _
    $region7: #{tpu_custom_call.1} parent=1 // pred_check_branch
      %24 = sbr.rel (0) target = $region9
    $region8: #{tpu_custom_call.1} parent=1 // pred_region
      %s26 = ssub.s32 12288, 12288
      %27 = vsyncadd [#allocation6], %s26
      %s28 = sshll.u32 [#allocation5], 4
      %s29 = int_to_ptr.vmem [resolvable:$true] %s28
      %34 = dma.hbm_to_vmem [thread:$0]  %s1, 12288, %s29, [#allocation6], 128, 128, 8
    $region9: #{tpu_custom_call.1} parent=1 // pred_fallthru
      _
    // Predicated region
    $region10: #{tpu_custom_call.1} parent=1 // pred_check
      _
    $region11: #{tpu_custom_call.1} parent=1 // pred_check_branch
      %36 = sbr.rel (0) target = $region13
    $region12: #{tpu_custom_call.1} parent=1 // pred_region
      _
    $region13: #{tpu_custom_call.1} parent=1 // pred_fallthru
      _
    // Predicated region
    $region14: #{tpu_custom_call.1} parent=1 // pred_check
      _
    $region15: #{tpu_custom_call.1} parent=1 // pred_check_branch
      %38 = sbr.rel (0) target = $region17
    $region16: #{tpu_custom_call.1} parent=1 // pred_region
      %39 = dma.done [#allocation3], 6144
    $region17: #{tpu_custom_call.1} parent=1 // pred_fallthru
      _
    // Predicated region
    $region18: #{tpu_custom_call.1} parent=1 // pred_check
      _
    $region19: #{tpu_custom_call.1} parent=1 // pred_check_branch
      %41 = sbr.rel (0) target = $region21
    $region20: #{tpu_custom_call.1} parent=1 // pred_region
      %42 = dma.done [#allocation6], 12288
    $region21: #{tpu_custom_call.1} parent=1 // pred_fallthru
      _
    %v43 = vld [vmem:[#allocation2] sm:$0xff]
    %v44 = vld [vmem:[#allocation2 + $0x8] sm:$0xff]
    %v45 = vld [vmem:[#allocation2 + $0x10] sm:$0xff]
    %v46 = vld [vmem:[#allocation2 + $0x18] sm:$0xff]
    %v47 = vld [vmem:[#allocation2 + $0x20] sm:$0xff]
    %v48 = vld [vmem:[#allocation2 + $0x28] sm:$0xff]
    %v49 = vld [vmem:[#allocation2 + $0x30] sm:$0xff]
    %v50 = vld [vmem:[#allocation2 + $0x38] sm:$0xff]
    %v51 = vld [vmem:[#allocation2 + $0x40] sm:$0xff]
    %v52 = vld [vmem:[#allocation2 + $0x48] sm:$0xff]
    %v53 = vld [vmem:[#allocation2 + $0x50] sm:$0xff]
    %v54 = vld [vmem:[#allocation2 + $0x58] sm:$0xff]
    %v55 = vld [vmem:[#allocation2 + $0x60] sm:$0xff]
    %v56 = vld [vmem:[#allocation2 + $0x68] sm:$0xff]
    %v57 = vld [vmem:[#allocation2 + $0x70] sm:$0xff]
    %v58 = vld [vmem:[#allocation2 + $0x78] sm:$0xff]
    %v59 = vld [vmem:[#allocation2 + $0x80] sm:$0xff]
    %v60 = vld [vmem:[#allocation2 + $0x88] sm:$0xff]
    %v61 = vld [vmem:[#allocation2 + $0x90] sm:$0xff]
    %v62 = vld [vmem:[#allocation2 + $0x98] sm:$0xff]
    %v63 = vld [vmem:[#allocation2 + $0xa0] sm:$0xff]
    %v64 = vld [vmem:[#allocation2 + $0xa8] sm:$0xff]
    %v65 = vld [vmem:[#allocation2 + $0xb0] sm:$0xff]
    %v66 = vld [vmem:[#allocation2 + $0xb8] sm:$0xff]
    %v67 = vld [vmem:[#allocation2 + $0xc0] sm:$0xff]
    %v68 = vld [vmem:[#allocation2 + $0xc8] sm:$0xff]
    %v69 = vld [vmem:[#allocation2 + $0xd0] sm:$0xff]
    %v70 = vld [vmem:[#allocation2 + $0xd8] sm:$0xff]
    %v71 = vld [vmem:[#allocation2 + $0xe0] sm:$0xff]
    %v72 = vld [vmem:[#allocation2 + $0xe8] sm:$0xff]
    %v73 = vld [vmem:[#allocation2 + $0xf0] sm:$0xff]
    %v74 = vld [vmem:[#allocation2 + $0xf8] sm:$0xff]
    %v75 = vld [vmem:[#allocation2 + $0x100] sm:$0xff]
    %v76 = vld [vmem:[#allocation2 + $0x108] sm:$0xff]
    %v77 = vld [vmem:[#allocation2 + $0x110] sm:$0xff]
    %v78 = vld [vmem:[#allocation2 + $0x118] sm:$0xff]
    %v79 = vld [vmem:[#allocation2 + $0x120] sm:$0xff]
    %v80 = vld [vmem:[#allocation2 + $0x128] sm:$0xff]
    %v81 = vld [vmem:[#allocation2 + $0x130] sm:$0xff]
    %v82 = vld [vmem:[#allocation2 + $0x138] sm:$0xff]
    %v83 = vld [vmem:[#allocation2 + $0x140] sm:$0xff]
    %v84 = vld [vmem:[#allocation2 + $0x148] sm:$0xff]
    %v85 = vld [vmem:[#allocation2 + $0x150] sm:$0xff]
    %v86 = vld [vmem:[#allocation2 + $0x158] sm:$0xff]
    %v87 = vld [vmem:[#allocation2 + $0x160] sm:$0xff]
    %v88 = vld [vmem:[#allocation2 + $0x168] sm:$0xff]
    %v89 = vld [vmem:[#allocation2 + $0x170] sm:$0xff]
    %v90 = vld [vmem:[#allocation2 + $0x178] sm:$0xff]
    %v91 = vrot.slane %v43, 4
    %v92 = vadd.f32 %v43, %v91
    %v93 = vrot.slane %v92, 2
    %v94 = vadd.f32 %v92, %v93
    %v95 = vrot.slane %v94, 1
    %v96 = vadd.f32 %v94, %v95
    %v97 = vrot.slane %v44, 4
    %v98 = vadd.f32 %v44, %v97
    %v99 = vrot.slane %v98, 2
    %v100 = vadd.f32 %v98, %v99
    %v101 = vrot.slane %v100, 1
    %v102 = vadd.f32 %v100, %v101
    %v103 = vrot.slane %v45, 4
    %v104 = vadd.f32 %v45, %v103
    %v105 = vrot.slane %v104, 2
    %v106 = vadd.f32 %v104, %v105
    %v107 = vrot.slane %v106, 1
    %v108 = vadd.f32 %v106, %v107
    %v109 = vrot.slane %v46, 4
    %v110 = vadd.f32 %v46, %v109
    %v111 = vrot.slane %v110, 2
    %v112 = vadd.f32 %v110, %v111
    %v113 = vrot.slane %v112, 1
    %v114 = vadd.f32 %v112, %v113
    %v115 = vrot.slane %v47, 4
    %v116 = vadd.f32 %v47, %v115
    %v117 = vrot.slane %v116, 2
    %v118 = vadd.f32 %v116, %v117
    %v119 = vrot.slane %v118, 1
    %v120 = vadd.f32 %v118, %v119
    %v121 = vrot.slane %v48, 4
    %v122 = vadd.f32 %v48, %v121
    %v123 = vrot.slane %v122, 2
    %v124 = vadd.f32 %v122, %v123
    %v125 = vrot.slane %v124, 1
    %v126 = vadd.f32 %v124, %v125
    %v127 = vrot.slane %v49, 4
    %v128 = vadd.f32 %v49, %v127
    %v129 = vrot.slane %v128, 2
    %v130 = vadd.f32 %v128, %v129
    %v131 = vrot.slane %v130, 1
    %v132 = vadd.f32 %v130, %v131
    %v133 = vrot.slane %v50, 4
    %v134 = vadd.f32 %v50, %v133
    %v135 = vrot.slane %v134, 2
    %v136 = vadd.f32 %v134, %v135
    %v137 = vrot.slane %v136, 1
    %v138 = vadd.f32 %v136, %v137
    %v139 = vrot.slane %v51, 4
    %v140 = vadd.f32 %v51, %v139
    %v141 = vrot.slane %v140, 2
    %v142 = vadd.f32 %v140, %v141
    %v143 = vrot.slane %v142, 1
    %v144 = vadd.f32 %v142, %v143
    %v145 = vrot.slane %v52, 4
    %v146 = vadd.f32 %v52, %v145
    %v147 = vrot.slane %v146, 2
    %v148 = vadd.f32 %v146, %v147
    %v149 = vrot.slane %v148, 1
    %v150 = vadd.f32 %v148, %v149
    %v151 = vrot.slane %v53, 4
    %v152 = vadd.f32 %v53, %v151
    %v153 = vrot.slane %v152, 2
    %v154 = vadd.f32 %v152, %v153
    %v155 = vrot.slane %v154, 1
    %v156 = vadd.f32 %v154, %v155
    %v157 = vrot.slane %v54, 4
    %v158 = vadd.f32 %v54, %v157
    %v159 = vrot.slane %v158, 2
    %v160 = vadd.f32 %v158, %v159
    %v161 = vrot.slane %v160, 1
    %v162 = vadd.f32 %v160, %v161
    %v163 = vrot.slane %v55, 4
    %v164 = vadd.f32 %v55, %v163
    %v165 = vrot.slane %v164, 2
    %v166 = vadd.f32 %v164, %v165
    %v167 = vrot.slane %v166, 1
    %v168 = vadd.f32 %v166, %v167
    %v169 = vrot.slane %v56, 4
    %v170 = vadd.f32 %v56, %v169
    %v171 = vrot.slane %v170, 2
    %v172 = vadd.f32 %v170, %v171
    %v173 = vrot.slane %v172, 1
    %v174 = vadd.f32 %v172, %v173
    %v175 = vrot.slane %v57, 4
    %v176 = vadd.f32 %v57, %v175
    %v177 = vrot.slane %v176, 2
    %v178 = vadd.f32 %v176, %v177
    %v179 = vrot.slane %v178, 1
    %v180 = vadd.f32 %v178, %v179
    %v181 = vrot.slane %v58, 4
    %v182 = vadd.f32 %v58, %v181
    %v183 = vrot.slane %v182, 2
    %v184 = vadd.f32 %v182, %v183
    %v185 = vrot.slane %v184, 1
    %v186 = vadd.f32 %v184, %v185
    %v187 = vrot.slane %v59, 4
    %v188 = vadd.f32 %v59, %v187
    %v189 = vrot.slane %v188, 2
    %v190 = vadd.f32 %v188, %v189
    %v191 = vrot.slane %v190, 1
    %v192 = vadd.f32 %v190, %v191
    %v193 = vrot.slane %v60, 4
    %v194 = vadd.f32 %v60, %v193
    %v195 = vrot.slane %v194, 2
    %v196 = vadd.f32 %v194, %v195
    %v197 = vrot.slane %v196, 1
    %v198 = vadd.f32 %v196, %v197
    %v199 = vrot.slane %v61, 4
    %v200 = vadd.f32 %v61, %v199
    %v201 = vrot.slane %v200, 2
    %v202 = vadd.f32 %v200, %v201
    %v203 = vrot.slane %v202, 1
    %v204 = vadd.f32 %v202, %v203
    %v205 = vrot.slane %v62, 4
    %v206 = vadd.f32 %v62, %v205
    %v207 = vrot.slane %v206, 2
    %v208 = vadd.f32 %v206, %v207
    %v209 = vrot.slane %v208, 1
    %v210 = vadd.f32 %v208, %v209
    %v211 = vrot.slane %v63, 4
    %v212 = vadd.f32 %v63, %v211
    %v213 = vrot.slane %v212, 2
    %v214 = vadd.f32 %v212, %v213
    %v215 = vrot.slane %v214, 1
    %v216 = vadd.f32 %v214, %v215
    %v217 = vrot.slane %v64, 4
    %v218 = vadd.f32 %v64, %v217
    %v219 = vrot.slane %v218, 2
    %v220 = vadd.f32 %v218, %v219
    %v221 = vrot.slane %v220, 1
    %v222 = vadd.f32 %v220, %v221
    %v223 = vrot.slane %v65, 4
    %v224 = vadd.f32 %v65, %v223
    %v225 = vrot.slane %v224, 2
    %v226 = vadd.f32 %v224, %v225
    %v227 = vrot.slane %v226, 1
    %v228 = vadd.f32 %v226, %v227
    %v229 = vrot.slane %v66, 4
    %v230 = vadd.f32 %v66, %v229
    %v231 = vrot.slane %v230, 2
    %v232 = vadd.f32 %v230, %v231
    %v233 = vrot.slane %v232, 1
    %v234 = vadd.f32 %v232, %v233
    %v235 = vrot.slane %v67, 4
    %v236 = vadd.f32 %v67, %v235
    %v237 = vrot.slane %v236, 2
    %v238 = vadd.f32 %v236, %v237
    %v239 = vrot.slane %v238, 1
    %v240 = vadd.f32 %v238, %v239
    %v241 = vrot.slane %v68, 4
    %v242 = vadd.f32 %v68, %v241
    %v243 = vrot.slane %v242, 2
    %v244 = vadd.f32 %v242, %v243
    %v245 = vrot.slane %v244, 1
    %v246 = vadd.f32 %v244, %v245
    %v247 = vrot.slane %v69, 4
    %v248 = vadd.f32 %v69, %v247
    %v249 = vrot.slane %v248, 2
    %v250 = vadd.f32 %v248, %v249
    %v251 = vrot.slane %v250, 1
    %v252 = vadd.f32 %v250, %v251
    %v253 = vrot.slane %v70, 4
    %v254 = vadd.f32 %v70, %v253
    %v255 = vrot.slane %v254, 2
    %v256 = vadd.f32 %v254, %v255
    %v257 = vrot.slane %v256, 1
    %v258 = vadd.f32 %v256, %v257
    %v259 = vrot.slane %v71, 4
    %v260 = vadd.f32 %v71, %v259
    %v261 = vrot.slane %v260, 2
    %v262 = vadd.f32 %v260, %v261
    %v263 = vrot.slane %v262, 1
    %v264 = vadd.f32 %v262, %v263
    %v265 = vrot.slane %v72, 4
    %v266 = vadd.f32 %v72, %v265
    %v267 = vrot.slane %v266, 2
    %v268 = vadd.f32 %v266, %v267
    %v269 = vrot.slane %v268, 1
    %v270 = vadd.f32 %v268, %v269
    %v271 = vrot.slane %v73, 4
    %v272 = vadd.f32 %v73, %v271
    %v273 = vrot.slane %v272, 2
    %v274 = vadd.f32 %v272, %v273
    %v275 = vrot.slane %v274, 1
    %v276 = vadd.f32 %v274, %v275
    %v277 = vrot.slane %v74, 4
    %v278 = vadd.f32 %v74, %v277
    %v279 = vrot.slane %v278, 2
    %v280 = vadd.f32 %v278, %v279
    %v281 = vrot.slane %v280, 1
    %v282 = vadd.f32 %v280, %v281
    %v283 = vrot.slane %v75, 4
    %v284 = vadd.f32 %v75, %v283
    %v285 = vrot.slane %v284, 2
    %v286 = vadd.f32 %v284, %v285
    %v287 = vrot.slane %v286, 1
    %v288 = vadd.f32 %v286, %v287
    %v289 = vrot.slane %v76, 4
    %v290 = vadd.f32 %v76, %v289
    %v291 = vrot.slane %v290, 2
    %v292 = vadd.f32 %v290, %v291
    %v293 = vrot.slane %v292, 1
    %v294 = vadd.f32 %v292, %v293
    %v295 = vrot.slane %v77, 4
    %v296 = vadd.f32 %v77, %v295
    %v297 = vrot.slane %v296, 2
    %v298 = vadd.f32 %v296, %v297
    %v299 = vrot.slane %v298, 1
    %v300 = vadd.f32 %v298, %v299
    %v301 = vrot.slane %v78, 4
    %v302 = vadd.f32 %v78, %v301
    %v303 = vrot.slane %v302, 2
    %v304 = vadd.f32 %v302, %v303
    %v305 = vrot.slane %v304, 1
    %v306 = vadd.f32 %v304, %v305
    %v307 = vrot.slane %v79, 4
    %v308 = vadd.f32 %v79, %v307
    %v309 = vrot.slane %v308, 2
    %v310 = vadd.f32 %v308, %v309
    %v311 = vrot.slane %v310, 1
    %v312 = vadd.f32 %v310, %v311
    %v313 = vrot.slane %v80, 4
    %v314 = vadd.f32 %v80, %v313
    %v315 = vrot.slane %v314, 2
    %v316 = vadd.f32 %v314, %v315
    %v317 = vrot.slane %v316, 1
    %v318 = vadd.f32 %v316, %v317
    %v319 = vrot.slane %v81, 4
    %v320 = vadd.f32 %v81, %v319
    %v321 = vrot.slane %v320, 2
    %v322 = vadd.f32 %v320, %v321
    %v323 = vrot.slane %v322, 1
    %v324 = vadd.f32 %v322, %v323
    %v325 = vrot.slane %v82, 4
    %v326 = vadd.f32 %v82, %v325
    %v327 = vrot.slane %v326, 2
    %v328 = vadd.f32 %v326, %v327
    %v329 = vrot.slane %v328, 1
    %v330 = vadd.f32 %v328, %v329
    %v331 = vrot.slane %v83, 4
    %v332 = vadd.f32 %v83, %v331
    %v333 = vrot.slane %v332, 2
    %v334 = vadd.f32 %v332, %v333
    %v335 = vrot.slane %v334, 1
    %v336 = vadd.f32 %v334, %v335
    %v337 = vrot.slane %v84, 4
    %v338 = vadd.f32 %v84, %v337
    %v339 = vrot.slane %v338, 2
    %v340 = vadd.f32 %v338, %v339
    %v341 = vrot.slane %v340, 1
    %v342 = vadd.f32 %v340, %v341
    %v343 = vrot.slane %v85, 4
    %v344 = vadd.f32 %v85, %v343
    %v345 = vrot.slane %v344, 2
    %v346 = vadd.f32 %v344, %v345
    %v347 = vrot.slane %v346, 1
    %v348 = vadd.f32 %v346, %v347
    %v349 = vrot.slane %v86, 4
    %v350 = vadd.f32 %v86, %v349
    %v351 = vrot.slane %v350, 2
    %v352 = vadd.f32 %v350, %v351
    %v353 = vrot.slane %v352, 1
    %v354 = vadd.f32 %v352, %v353
    %v355 = vrot.slane %v87, 4
    %v356 = vadd.f32 %v87, %v355
    %v357 = vrot.slane %v356, 2
    %v358 = vadd.f32 %v356, %v357
    %v359 = vrot.slane %v358, 1
    %v360 = vadd.f32 %v358, %v359
    %v361 = vrot.slane %v88, 4
    %v362 = vadd.f32 %v88, %v361
    %v363 = vrot.slane %v362, 2
    %v364 = vadd.f32 %v362, %v363
    %v365 = vrot.slane %v364, 1
    %v366 = vadd.f32 %v364, %v365
    %v367 = vrot.slane %v89, 4
    %v368 = vadd.f32 %v89, %v367
    %v369 = vrot.slane %v368, 2
    %v370 = vadd.f32 %v368, %v369
    %v371 = vrot.slane %v370, 1
    %v372 = vadd.f32 %v370, %v371
    %v373 = vrot.slane %v90, 4
    %v374 = vadd.f32 %v90, %v373
    %v375 = vrot.slane %v374, 2
    %v376 = vadd.f32 %v374, %v375
    %v377 = vrot.slane %v376, 1
    %v378 = vadd.f32 %v376, %v377
    %v379 = vrcp.pop 8.0
    %v380 = vmul.f32 %v96, %v379
    %v381 = vmul.f32 %v102, %v379
    %v382 = vmul.f32 %v108, %v379
    %v383 = vmul.f32 %v114, %v379
    %v384 = vmul.f32 %v120, %v379
    %v385 = vmul.f32 %v126, %v379
    %v386 = vmul.f32 %v132, %v379
    %v387 = vmul.f32 %v138, %v379
    %v388 = vmul.f32 %v144, %v379
    %v389 = vmul.f32 %v150, %v379
    %v390 = vmul.f32 %v156, %v379
    %v391 = vmul.f32 %v162, %v379
    %v392 = vmul.f32 %v168, %v379
    %v393 = vmul.f32 %v174, %v379
    %v394 = vmul.f32 %v180, %v379
    %v395 = vmul.f32 %v186, %v379
    %v396 = vmul.f32 %v192, %v379
    %v397 = vmul.f32 %v198, %v379
    %v398 = vmul.f32 %v204, %v379
    %v399 = vmul.f32 %v210, %v379
    %v400 = vmul.f32 %v216, %v379
    %v401 = vmul.f32 %v222, %v379
    %v402 = vmul.f32 %v228, %v379
    %v403 = vmul.f32 %v234, %v379
    %v404 = vmul.f32 %v240, %v379
    %v405 = vmul.f32 %v246, %v379
    %v406 = vmul.f32 %v252, %v379
    %v407 = vmul.f32 %v258, %v379
    %v408 = vmul.f32 %v264, %v379
    %v409 = vmul.f32 %v270, %v379
    %v410 = vmul.f32 %v276, %v379
    %v411 = vmul.f32 %v282, %v379
    %v412 = vmul.f32 %v288, %v379
    %v413 = vmul.f32 %v294, %v379
    %v414 = vmul.f32 %v300, %v379
    %v415 = vmul.f32 %v306, %v379
    %v416 = vmul.f32 %v312, %v379
    %v417 = vmul.f32 %v318, %v379
    %v418 = vmul.f32 %v324, %v379
    %v419 = vmul.f32 %v330, %v379
    %v420 = vmul.f32 %v336, %v379
    %v421 = vmul.f32 %v342, %v379
    %v422 = vmul.f32 %v348, %v379
    %v423 = vmul.f32 %v354, %v379
    %v424 = vmul.f32 %v360, %v379
    %v425 = vmul.f32 %v366, %v379
    %v426 = vmul.f32 %v372, %v379
    %v427 = vmul.f32 %v378, %v379
    %v428 = vld [vmem:[#allocation5] sm:$0xff]
    %v429 = vld [vmem:[#allocation5 + $0x8] sm:$0xff]
    %v430 = vld [vmem:[#allocation5 + $0x10] sm:$0xff]
    %v431 = vld [vmem:[#allocation5 + $0x18] sm:$0xff]
    %v432 = vld [vmem:[#allocation5 + $0x20] sm:$0xff]
    %v433 = vld [vmem:[#allocation5 + $0x28] sm:$0xff]
    %v434 = vld [vmem:[#allocation5 + $0x30] sm:$0xff]
    %v435 = vld [vmem:[#allocation5 + $0x38] sm:$0xff]
    %v436 = vld [vmem:[#allocation5 + $0x40] sm:$0xff]
    %v437 = vld [vmem:[#allocation5 + $0x48] sm:$0xff]
    %v438 = vld [vmem:[#allocation5 + $0x50] sm:$0xff]
    %v439 = vld [vmem:[#allocation5 + $0x58] sm:$0xff]
    %v440 = vld [vmem:[#allocation5 + $0x60] sm:$0xff]
    %v441 = vld [vmem:[#allocation5 + $0x68] sm:$0xff]
    %v442 = vld [vmem:[#allocation5 + $0x70] sm:$0xff]
    %v443 = vld [vmem:[#allocation5 + $0x78] sm:$0xff]
    %v444 = vld [vmem:[#allocation5 + $0x80] sm:$0xff]
    %v445 = vld [vmem:[#allocation5 + $0x88] sm:$0xff]
    %v446 = vld [vmem:[#allocation5 + $0x90] sm:$0xff]
    %v447 = vld [vmem:[#allocation5 + $0x98] sm:$0xff]
    %v448 = vld [vmem:[#allocation5 + $0xa0] sm:$0xff]
    %v449 = vld [vmem:[#allocation5 + $0xa8] sm:$0xff]
    %v450 = vld [vmem:[#allocation5 + $0xb0] sm:$0xff]
    %v451 = vld [vmem:[#allocation5 + $0xb8] sm:$0xff]
    %v452 = vld [vmem:[#allocation5 + $0xc0] sm:$0xff]
    %v453 = vld [vmem:[#allocation5 + $0xc8] sm:$0xff]
    %v454 = vld [vmem:[#allocation5 + $0xd0] sm:$0xff]
    %v455 = vld [vmem:[#allocation5 + $0xd8] sm:$0xff]
    %v456 = vld [vmem:[#allocation5 + $0xe0] sm:$0xff]
    %v457 = vld [vmem:[#allocation5 + $0xe8] sm:$0xff]
    %v458 = vld [vmem:[#allocation5 + $0xf0] sm:$0xff]
    %v459 = vld [vmem:[#allocation5 + $0xf8] sm:$0xff]
    %v460 = vld [vmem:[#allocation5 + $0x100] sm:$0xff]
    %v461 = vld [vmem:[#allocation5 + $0x108] sm:$0xff]
    %v462 = vld [vmem:[#allocation5 + $0x110] sm:$0xff]
    %v463 = vld [vmem:[#allocation5 + $0x118] sm:$0xff]
    %v464 = vld [vmem:[#allocation5 + $0x120] sm:$0xff]
    %v465 = vld [vmem:[#allocation5 + $0x128] sm:$0xff]
    %v466 = vld [vmem:[#allocation5 + $0x130] sm:$0xff]
    %v467 = vld [vmem:[#allocation5 + $0x138] sm:$0xff]
    %v468 = vld [vmem:[#allocation5 + $0x140] sm:$0xff]
    %v469 = vld [vmem:[#allocation5 + $0x148] sm:$0xff]
    %v470 = vld [vmem:[#allocation5 + $0x150] sm:$0xff]
    %v471 = vld [vmem:[#allocation5 + $0x158] sm:$0xff]
    %v472 = vld [vmem:[#allocation5 + $0x160] sm:$0xff]
    %v473 = vld [vmem:[#allocation5 + $0x168] sm:$0xff]
    %v474 = vld [vmem:[#allocation5 + $0x170] sm:$0xff]
    %v475 = vld [vmem:[#allocation5 + $0x178] sm:$0xff]
    %v476 = vld [vmem:[#allocation5 + $0x180] sm:$0xff]
    %v477 = vld [vmem:[#allocation5 + $0x188] sm:$0xff]
    %v478 = vld [vmem:[#allocation5 + $0x190] sm:$0xff]
    %v479 = vld [vmem:[#allocation5 + $0x198] sm:$0xff]
    %v480 = vld [vmem:[#allocation5 + $0x1a0] sm:$0xff]
    %v481 = vld [vmem:[#allocation5 + $0x1a8] sm:$0xff]
    %v482 = vld [vmem:[#allocation5 + $0x1b0] sm:$0xff]
    %v483 = vld [vmem:[#allocation5 + $0x1b8] sm:$0xff]
    %v484 = vld [vmem:[#allocation5 + $0x1c0] sm:$0xff]
    %v485 = vld [vmem:[#allocation5 + $0x1c8] sm:$0xff]
    %v486 = vld [vmem:[#allocation5 + $0x1d0] sm:$0xff]
    %v487 = vld [vmem:[#allocation5 + $0x1d8] sm:$0xff]
    %v488 = vld [vmem:[#allocation5 + $0x1e0] sm:$0xff]
    %v489 = vld [vmem:[#allocation5 + $0x1e8] sm:$0xff]
    %v490 = vld [vmem:[#allocation5 + $0x1f0] sm:$0xff]
    %v491 = vld [vmem:[#allocation5 + $0x1f8] sm:$0xff]
    %v492 = vld [vmem:[#allocation5 + $0x200] sm:$0xff]
    %v493 = vld [vmem:[#allocation5 + $0x208] sm:$0xff]
    %v494 = vld [vmem:[#allocation5 + $0x210] sm:$0xff]
    %v495 = vld [vmem:[#allocation5 + $0x218] sm:$0xff]
    %v496 = vld [vmem:[#allocation5 + $0x220] sm:$0xff]
    %v497 = vld [vmem:[#allocation5 + $0x228] sm:$0xff]
    %v498 = vld [vmem:[#allocation5 + $0x230] sm:$0xff]
    %v499 = vld [vmem:[#allocation5 + $0x238] sm:$0xff]
    %v500 = vld [vmem:[#allocation5 + $0x240] sm:$0xff]
    %v501 = vld [vmem:[#allocation5 + $0x248] sm:$0xff]
    %v502 = vld [vmem:[#allocation5 + $0x250] sm:$0xff]
    %v503 = vld [vmem:[#allocation5 + $0x258] sm:$0xff]
    %v504 = vld [vmem:[#allocation5 + $0x260] sm:$0xff]
    %v505 = vld [vmem:[#allocation5 + $0x268] sm:$0xff]
    %v506 = vld [vmem:[#allocation5 + $0x270] sm:$0xff]
    %v507 = vld [vmem:[#allocation5 + $0x278] sm:$0xff]
    %v508 = vld [vmem:[#allocation5 + $0x280] sm:$0xff]
    %v509 = vld [vmem:[#allocation5 + $0x288] sm:$0xff]
    %v510 = vld [vmem:[#allocation5 + $0x290] sm:$0xff]
    %v511 = vld [vmem:[#allocation5 + $0x298] sm:$0xff]
    %v512 = vld [vmem:[#allocation5 + $0x2a0] sm:$0xff]
    %v513 = vld [vmem:[#allocation5 + $0x2a8] sm:$0xff]
    %v514 = vld [vmem:[#allocation5 + $0x2b0] sm:$0xff]
    %v515 = vld [vmem:[#allocation5 + $0x2b8] sm:$0xff]
    %v516 = vld [vmem:[#allocation5 + $0x2c0] sm:$0xff]
    %v517 = vld [vmem:[#allocation5 + $0x2c8] sm:$0xff]
    %v518 = vld [vmem:[#allocation5 + $0x2d0] sm:$0xff]
    %v519 = vld [vmem:[#allocation5 + $0x2d8] sm:$0xff]
    %v520 = vld [vmem:[#allocation5 + $0x2e0] sm:$0xff]
    %v521 = vld [vmem:[#allocation5 + $0x2e8] sm:$0xff]
    %v522 = vld [vmem:[#allocation5 + $0x2f0] sm:$0xff]
    %v523 = vld [vmem:[#allocation5 + $0x2f8] sm:$0xff]
    %v524 = vld [vmem:[%s2] sm:$0x1]
    %v526 = vlaneseq
    %v527 = vshrl.u32 %v526, 7
    %v528 = vsub.s32 0, %v527
    %v529 = vrot.slane %v524, %v528
    %vm579 = vcmask 1041409
    %v580 = vsel %vm579, %v386, %v380
    %vm581 = vcmask 1042434
    %v582 = vsel %vm581, %v392, %v580
    %vm583 = vcmask 1043459
    %v584 = vsel %vm583, %v398, %v582
    %vm585 = vcmask 1044484
    %v586 = vsel %vm585, %v404, %v584
    %vm587 = vcmask 1045509
    %v588 = vsel %vm587, %v410, %v586
    %vm589 = vcmask 1046534
    %v590 = vsel %vm589, %v416, %v588
    %vm591 = vcmask 1047559
    %v592 = vsel %vm591, %v422, %v590
    %v593 = vsel %vm579, %v387, %v381
    %v594 = vsel %vm581, %v393, %v593
    %v595 = vsel %vm583, %v399, %v594
    %v596 = vsel %vm585, %v405, %v595
    %v597 = vsel %vm587, %v411, %v596
    %v598 = vsel %vm589, %v417, %v597
    %v599 = vsel %vm591, %v423, %v598
    %v600 = vsel %vm579, %v388, %v382
    %v601 = vsel %vm581, %v394, %v600
    %v602 = vsel %vm583, %v400, %v601
    %v603 = vsel %vm585, %v406, %v602
    %v604 = vsel %vm587, %v412, %v603
    %v605 = vsel %vm589, %v418, %v604
    %v606 = vsel %vm591, %v424, %v605
    %v607 = vsel %vm579, %v389, %v383
    %v608 = vsel %vm581, %v395, %v607
    %v609 = vsel %vm583, %v401, %v608
    %v610 = vsel %vm585, %v407, %v609
    %v611 = vsel %vm587, %v413, %v610
    %v612 = vsel %vm589, %v419, %v611
    %v613 = vsel %vm591, %v425, %v612
    %v614 = vsel %vm579, %v390, %v384
    %v615 = vsel %vm581, %v396, %v614
    %v616 = vsel %vm583, %v402, %v615
    %v617 = vsel %vm585, %v408, %v616
    %v618 = vsel %vm587, %v414, %v617
    %v619 = vsel %vm589, %v420, %v618
    %v620 = vsel %vm591, %v426, %v619
    %v621 = vsel %vm579, %v391, %v385
    %v622 = vsel %vm581, %v397, %v621
    %v623 = vsel %vm583, %v403, %v622
    %v624 = vsel %vm585, %v409, %v623
    %v625 = vsel %vm587, %v415, %v624
    %v626 = vsel %vm589, %v421, %v625
    %v627 = vsel %vm591, %v427, %v626
    %634 = vmatprep.subr.mxu0 0.0
    %635 = vmatpush1.msra.mxu0 %v428
    %636 = vmatprep.subr.mxu0 0.0
    %637 = vmatpush1.msra.mxu0 %v429
    %638 = vmatprep.subr.mxu0 0.0
    %639 = vmatpush1.msra.mxu0 %v430
    %640 = vmatprep.subr.mxu0 0.0
    %641 = vmatpush1.msra.mxu0 %v431
    %642 = vmatprep.subr.mxu0 0.0
    %643 = vmatpush1.msra.mxu0 %v432
    %644 = vmatprep.subr.mxu0 0.0
    %645 = vmatpush1.msra.mxu0 %v433
    %646 = vmatprep.subr.mxu0 0.0
    %647 = vmatpush1.msra.mxu0 %v434
    %648 = vmatprep.subr.mxu0 0.0
    %649 = vmatpush1.msra.mxu0 %v435
    %650 = vmatprep.subr.mxu0 0.0
    %651 = vmatpush1.msra.mxu0 %v436
    %652 = vmatprep.subr.mxu0 0.0
    %653 = vmatpush1.msra.mxu0 %v437
    %654 = vmatprep.subr.mxu0 0.0
    %655 = vmatpush1.msra.mxu0 %v438
    %656 = vmatprep.subr.mxu0 0.0
    %657 = vmatpush1.msra.mxu0 %v439
    %658 = vmatprep.subr.mxu0 0.0
    %659 = vmatpush1.msra.mxu0 %v440
    %660 = vmatprep.subr.mxu0 0.0
    %661 = vmatpush1.msra.mxu0 %v441
    %662 = vmatprep.subr.mxu0 0.0
    %663 = vmatpush1.msra.mxu0 %v442
    %664 = vmatprep.subr.mxu0 0.0
    %665 = vmatpush1.msra.mxu0 %v443
    %666 = vmatprep.subr.mxu0 0.0
    %667 = vmatpush1.msra.mxu0 %v444
    %668 = vmatprep.subr.mxu0 0.0
    %669 = vmatpush1.msra.mxu0 %v445
    %670 = vmatprep.subr.mxu0 0.0
    %671 = vmatpush1.msra.mxu0 %v446
    %672 = vmatprep.subr.mxu0 0.0
    %673 = vmatpush1.msra.mxu0 %v447
    %674 = vmatprep.subr.mxu0 0.0
    %675 = vmatpush1.msra.mxu0 %v448
    %676 = vmatprep.subr.mxu0 0.0
    %677 = vmatpush1.msra.mxu0 %v449
    %678 = vmatprep.subr.mxu0 0.0
    %679 = vmatpush1.msra.mxu0 %v450
    %680 = vmatprep.subr.mxu0 0.0
    %681 = vmatpush1.msra.mxu0 %v451
    %682 = vmatprep.subr.mxu0 0.0
    %683 = vmatpush1.msra.mxu0 %v452
    %684 = vmatprep.subr.mxu0 0.0
    %685 = vmatpush1.msra.mxu0 %v453
    %686 = vmatprep.subr.mxu0 0.0
    %687 = vmatpush1.msra.mxu0 %v454
    %688 = vmatprep.subr.mxu0 0.0
    %689 = vmatpush1.msra.mxu0 %v455
    %690 = vmatprep.subr.mxu0 0.0
    %691 = vmatpush1.msra.mxu0 %v456
    %692 = vmatprep.subr.mxu0 0.0
    %693 = vmatpush1.msra.mxu0 %v457
    %694 = vmatprep.subr.mxu0 0.0
    %695 = vmatpush1.msra.mxu0 %v458
    %696 = vmatprep.subr.mxu0 0.0
    %697 = vmatpush1.msra.mxu0 %v459
    %698 = vmatprep.mubr.f32.mxu0 %v599
    %699 = vmatmul.mubr.f32.gmra.mrb[0].mxu0 %v592
    %v700 = vpop.f32.mrb[0].mxu0
    %v701 = vadd.f32 %v529, %v700
    %v702 = vpop.f32.mrb[0].mxu0
    %703 = vdwg.mxu0
    %704 = vmatprep.subr.mxu0 0.0
    %705 = vmatpush1.msra.mxu0 %v460
    %706 = vmatprep.subr.mxu0 0.0
    %707 = vmatpush1.msra.mxu0 %v461
    %708 = vmatprep.subr.mxu0 0.0
    %709 = vmatpush1.msra.mxu0 %v462
    %710 = vmatprep.subr.mxu0 0.0
    %711 = vmatpush1.msra.mxu0 %v463
    %712 = vmatprep.subr.mxu0 0.0
    %713 = vmatpush1.msra.mxu0 %v464
    %714 = vmatprep.subr.mxu0 0.0
    %715 = vmatpush1.msra.mxu0 %v465
    %716 = vmatprep.subr.mxu0 0.0
    %717 = vmatpush1.msra.mxu0 %v466
    %718 = vmatprep.subr.mxu0 0.0
    %719 = vmatpush1.msra.mxu0 %v467
    %720 = vmatprep.subr.mxu0 0.0
    %721 = vmatpush1.msra.mxu0 %v468
    %722 = vmatprep.subr.mxu0 0.0
    %723 = vmatpush1.msra.mxu0 %v469
    %724 = vmatprep.subr.mxu0 0.0
    %725 = vmatpush1.msra.mxu0 %v470
    %726 = vmatprep.subr.mxu0 0.0
    %727 = vmatpush1.msra.mxu0 %v471
    %728 = vmatprep.subr.mxu0 0.0
    %729 = vmatpush1.msra.mxu0 %v472
    %730 = vmatprep.subr.mxu0 0.0
    %731 = vmatpush1.msra.mxu0 %v473
    %732 = vmatprep.subr.mxu0 0.0
    %733 = vmatpush1.msra.mxu0 %v474
    %734 = vmatprep.subr.mxu0 0.0
    %735 = vmatpush1.msra.mxu0 %v475
    %736 = vmatprep.subr.mxu0 0.0
    %737 = vmatpush1.msra.mxu0 %v476
    %738 = vmatprep.subr.mxu0 0.0
    %739 = vmatpush1.msra.mxu0 %v477
    %740 = vmatprep.subr.mxu0 0.0
    %741 = vmatpush1.msra.mxu0 %v478
    %742 = vmatprep.subr.mxu0 0.0
    %743 = vmatpush1.msra.mxu0 %v479
    %744 = vmatprep.subr.mxu0 0.0
    %745 = vmatpush1.msra.mxu0 %v480
    %746 = vmatprep.subr.mxu0 0.0
    %747 = vmatpush1.msra.mxu0 %v481
    %748 = vmatprep.subr.mxu0 0.0
    %749 = vmatpush1.msra.mxu0 %v482
    %750 = vmatprep.subr.mxu0 0.0
    %751 = vmatpush1.msra.mxu0 %v483
    %752 = vmatprep.subr.mxu0 0.0
    %753 = vmatpush1.msra.mxu0 %v484
    %754 = vmatprep.subr.mxu0 0.0
    %755 = vmatpush1.msra.mxu0 %v485
    %756 = vmatprep.subr.mxu0 0.0
    %757 = vmatpush1.msra.mxu0 %v486
    %758 = vmatprep.subr.mxu0 0.0
    %759 = vmatpush1.msra.mxu0 %v487
    %760 = vmatprep.subr.mxu0 0.0
    %761 = vmatpush1.msra.mxu0 %v488
    %762 = vmatprep.subr.mxu0 0.0
    %763 = vmatpush1.msra.mxu0 %v489
    %764 = vmatprep.subr.mxu0 0.0
    %765 = vmatpush1.msra.mxu0 %v490
    %766 = vmatprep.subr.mxu0 0.0
    %767 = vmatpush1.msra.mxu0 %v491
    %768 = vmatprep.mubr.f32.mxu0 %v613
    %769 = vmatmul.mubr.f32.gmra.mrb[0].mxu0 %v606
    %v770 = vpop.f32.mrb[0].mxu0
    %v771 = vadd.f32 %v701, %v770
    %v772 = vpop.f32.mrb[0].mxu0
    %773 = vdwg.mxu0
    %774 = vmatprep.subr.mxu0 0.0
    %775 = vmatpush1.msra.mxu0 %v492
    %776 = vmatprep.subr.mxu0 0.0
    %777 = vmatpush1.msra.mxu0 %v493
    %778 = vmatprep.subr.mxu0 0.0
    %779 = vmatpush1.msra.mxu0 %v494
    %780 = vmatprep.subr.mxu0 0.0
    %781 = vmatpush1.msra.mxu0 %v495
    %782 = vmatprep.subr.mxu0 0.0
    %783 = vmatpush1.msra.mxu0 %v496
    %784 = vmatprep.subr.mxu0 0.0
    %785 = vmatpush1.msra.mxu0 %v497
    %786 = vmatprep.subr.mxu0 0.0
    %787 = vmatpush1.msra.mxu0 %v498
    %788 = vmatprep.subr.mxu0 0.0
    %789 = vmatpush1.msra.mxu0 %v499
    %790 = vmatprep.subr.mxu0 0.0
    %791 = vmatpush1.msra.mxu0 %v500
    %792 = vmatprep.subr.mxu0 0.0
    %793 = vmatpush1.msra.mxu0 %v501
    %794 = vmatprep.subr.mxu0 0.0
    %795 = vmatpush1.msra.mxu0 %v502
    %796 = vmatprep.subr.mxu0 0.0
    %797 = vmatpush1.msra.mxu0 %v503
    %798 = vmatprep.subr.mxu0 0.0
    %799 = vmatpush1.msra.mxu0 %v504
    %800 = vmatprep.subr.mxu0 0.0
    %801 = vmatpush1.msra.mxu0 %v505
    %802 = vmatprep.subr.mxu0 0.0
    %803 = vmatpush1.msra.mxu0 %v506
    %804 = vmatprep.subr.mxu0 0.0
    %805 = vmatpush1.msra.mxu0 %v507
    %806 = vmatprep.subr.mxu0 0.0
    %807 = vmatpush1.msra.mxu0 %v508
    %808 = vmatprep.subr.mxu0 0.0
    %809 = vmatpush1.msra.mxu0 %v509
    %810 = vmatprep.subr.mxu0 0.0
    %811 = vmatpush1.msra.mxu0 %v510
    %812 = vmatprep.subr.mxu0 0.0
    %813 = vmatpush1.msra.mxu0 %v511
    %814 = vmatprep.subr.mxu0 0.0
    %815 = vmatpush1.msra.mxu0 %v512
    %816 = vmatprep.subr.mxu0 0.0
    %817 = vmatpush1.msra.mxu0 %v513
    %818 = vmatprep.subr.mxu0 0.0
    %819 = vmatpush1.msra.mxu0 %v514
    %820 = vmatprep.subr.mxu0 0.0
    %821 = vmatpush1.msra.mxu0 %v515
    %822 = vmatprep.subr.mxu0 0.0
    %823 = vmatpush1.msra.mxu0 %v516
    %824 = vmatprep.subr.mxu0 0.0
    %825 = vmatpush1.msra.mxu0 %v517
    %826 = vmatprep.subr.mxu0 0.0
    %827 = vmatpush1.msra.mxu0 %v518
    %828 = vmatprep.subr.mxu0 0.0
    %829 = vmatpush1.msra.mxu0 %v519
    %830 = vmatprep.subr.mxu0 0.0
    %831 = vmatpush1.msra.mxu0 %v520
    %832 = vmatprep.subr.mxu0 0.0
    %833 = vmatpush1.msra.mxu0 %v521
    %834 = vmatprep.subr.mxu0 0.0
    %835 = vmatpush1.msra.mxu0 %v522
    %836 = vmatprep.subr.mxu0 0.0
    %837 = vmatpush1.msra.mxu0 %v523
    %838 = vmatprep.mubr.f32.mxu0 %v627
    %839 = vmatmul.mubr.f32.gmra.mrb[0].mxu0 %v620
    %v840 = vpop.f32.mrb[0].mxu0
    %v841 = vadd.f32 %v771, %v840
    %v842 = vpop.f32.mrb[0].mxu0
    %843 = vdwg.mxu0
    %844 = vst [vmem:[#allocation7] sm:$0xff] %v841
    // Predicated region
    $region22: #{tpu_custom_call.1} parent=1 // pred_check
      _
    $region23: #{tpu_custom_call.1} parent=1 // pred_check_branch
      %846 = sbr.rel (0) target = $region25
    $region24: #{tpu_custom_call.1} parent=1 // pred_region
      %s848 = ssub.s32 128, 128
      %849 = vsyncadd [#allocation4], %s848
      %s851 = sshll.u32 [#allocation7], 4
      %s852 = int_to_ptr.vmem [resolvable:$true] %s851
      %854 = dma.vmem_to_hbm [thread:$0]  %s852, 128, %s3, [#allocation4]
    $region25: #{tpu_custom_call.1} parent=1 // pred_fallthru
      _
    // Predicated region
    $region26: #{tpu_custom_call.1} parent=1 // pred_check
      _
    $region27: #{tpu_custom_call.1} parent=1 // pred_check_branch
      %856 = sbr.rel (0) target = $region29
    $region28: #{tpu_custom_call.1} parent=1 // pred_region
      %857 = dma.done [#allocation4], 128
    $region29: #{tpu_custom_call.1} parent=1 // pred_fallthru
      _
    %858 = vsyncpa [#allocation3], 1
    %859 = vsyncpa [#allocation6], 1
    %860 = vsyncpa [#allocation4], 1

</llo_original>
